<compile_context>
chip_gen: v5e
topology: v5e:2x2
jax: 0.10.0
libtpu: 0.0.40
codegen_flags: <defaults>
</compile_context>

<pallas_src>
import math
from functools import partial

import jax
import jax.numpy as jnp
from jax import lax
from jax.experimental import pallas as pl
from jax.experimental.pallas import tpu as pltpu


def _sdpa_kernel(q_ref, k_ref, v_ref, o_ref, acc_ref, denom_ref,
                 *, scale, sk, tk, matmul_dtype):
    # Blocks: q (1, tq, d_k), k (1, tk, d_k), v (1, tk, dvp), o (1, tq, dvp)
    # Scratch: acc (tq, dvp) f32, denom (tq, 1) f32 -- persist across the kv axis.
    kv = pl.program_id(2)

    @pl.when(kv == 0)
    def _init():
        acc_ref[...] = jnp.zeros_like(acc_ref)
        denom_ref[...] = jnp.zeros_like(denom_ref)

    # Fold 1/sqrt(d_k) into q (small operand) in f32, then cast for the MXU.
    q = (q_ref[0].astype(jnp.float32) * scale).astype(matmul_dtype)
    k = k_ref[0].astype(matmul_dtype)

    # QK^T with contraction on the last dims -> no explicit transpose of K.
    scores = lax.dot_general(
        q, k,
        dimension_numbers=(((1,), (1,)), ((), ())),
        preferred_element_type=jnp.float32,
    )                                                   # (tq, tk) f32

    # Exactly as the PyTorch module: plain exp (no max subtraction).
    p = jnp.exp(scores)

    if sk % tk != 0:
        # Trailing partial KV tile: zero out contributions from padded key rows
        # (otherwise they would pollute every query row's sum).  Static Python
        # condition -> no cost when Sk divides evenly.
        key_idx = kv * tk + lax.broadcasted_iota(jnp.int32, p.shape, 1)
        p = jnp.where(key_idx < sk, p, 0.0)

    # Running (unnormalized) softmax denominator and PV product.
    denom_ref[...] += jnp.sum(p, axis=-1, keepdims=True)
    acc_ref[...] += jnp.dot(p.astype(matmul_dtype), v_ref[0].astype(matmul_dtype),
                            preferred_element_type=jnp.float32)

    @pl.when(kv == pl.num_programs(2) - 1)
    def _finalize():
        # dropout(p=0.1) is identity at inference.
        inv = pl.reciprocal(denom_ref[...], approx=True)   # EUP vrcp
        o_ref[0] = (acc_ref[...] * inv).astype(o_ref.dtype)


def _pad_last(x, multiple):
    pad = (-x.shape[-1]) % multiple
    if pad:
        x = jnp.pad(x, [(0, 0)] * (x.ndim - 1) + [(0, pad)])
    return x


def scaled_dot_product_attention(q, k, v, mask=None, *, tq=None, tk=None,
                                 matmul_dtype=jnp.bfloat16):
    """q: (B, Sq, d_k), k: (B, Sk, d_k), v: (B, Sk, d_v) -> (B, Sq, d_v)."""
    if mask is not None:
        # TODO(synk): optional boolean mask (attn.masked_fill(mask, 0)) not implemented;
        # only the default mask=None path of the module is supported.
        raise NotImplementedError("mask is not supported by this Pallas kernel")

    B, Sq, d_k = q.shape
    Bk, Sk, d_k2 = k.shape
    Bv, Sk2, d_v = v.shape
    assert d_k == d_k2 and B == Bk == Bv and Sk == Sk2

    scale = 1.0 / math.sqrt(d_k)   # ORIGINAL d_k (k.size(-1)), as in the module

    # Only d_v (the output / PV last dim) is zero-padded to 128 for lane-dense
    # stores; padded columns are all-zero outputs and are sliced away.  d_k is
    # left as-is: full-extent last dims are legal and padding it would inflate
    # q/k DMA traffic and QK^T MXU work with zero columns.
    vp = _pad_last(v, 128)
    dvp = vp.shape[-1]

    # Query tile: 256 fills the 256-wide MXU on v6e/v7x (128 is fine on v5e).
    if tq is None:
        tq = Sq if Sq <= 256 else 256
    # KV streaming tile.
    if tk is None:
        tk = Sk if Sk <= 512 else 512
    num_q_tiles = pl.cdiv(Sq, tq)
    num_kv_tiles = pl.cdiv(Sk, tk)

    # Explicit VMEM budget: double-buffered blocks + f32 scratch + score temps,
    # with headroom, capped at v7x physical VMEM per TensorCore (64 MiB).
    in_item = jnp.dtype(q.dtype).itemsize
    vmem_need = (
        2 * tq * d_k * in_item          # q blocks (double-buffered)
        + 2 * tk * d_k * in_item        # k blocks
        + 2 * tk * dvp * in_item        # v blocks
        + 2 * tq * dvp * in_item        # out blocks
        + tq * dvp * 4                  # f32 PV accumulator
        + tq * 128 * 4                  # f32 denominator (lane-padded)
        + 3 * tq * max(tk, 128) * 4     # scores / exp / mask temporaries
    )
    vmem_limit = int(min(max(2 * vmem_need + (4 << 20), 16 << 20), 64 << 20))

    kernel = partial(_sdpa_kernel, scale=scale, sk=Sk, tk=tk,
                     matmul_dtype=matmul_dtype)

    out_padded = pl.pallas_call(
        kernel,
        out_shape=jax.ShapeDtypeStruct((B, Sq, dvp), q.dtype),
        grid_spec=pltpu.PrefetchScalarGridSpec(
            num_scalar_prefetch=0,
            grid=(B, num_q_tiles, num_kv_tiles),
            in_specs=[
                pl.BlockSpec((1, tq, d_k), lambda b, i, kv: (b, i, 0)),   # q tile
                pl.BlockSpec((1, tk, d_k), lambda b, i, kv: (b, kv, 0)),  # K tile (streamed)
                pl.BlockSpec((1, tk, dvp), lambda b, i, kv: (b, kv, 0)),  # V tile (streamed)
            ],
            out_specs=pl.BlockSpec((1, tq, dvp), lambda b, i, kv: (b, i, 0)),
            scratch_shapes=[
                pltpu.VMEM((tq, dvp), jnp.float32),   # PV accumulator
                pltpu.VMEM((tq, 1), jnp.float32),     # running denominator
            ],
        ),
        compiler_params=pltpu.CompilerParams(
            dimension_semantics=("parallel", "parallel", "arbitrary"),
            vmem_limit_bytes=vmem_limit,
        ),
    )(q, k, vp)

    return out_padded[..., :d_v]


def scaled_dot_product_attention_ref(q, k, v):
    """Pure-JAX reference (mirrors the PyTorch module, mask=None, eval mode)."""
    d_k = k.shape[-1]
    attn = jnp.einsum("bqd,bkd->bqk", q.astype(jnp.float32), k.astype(jnp.float32))
    attn = attn / math.sqrt(d_k)
    attn = jnp.exp(attn)
    attn = attn / attn.sum(-1, keepdims=True)
    return jnp.einsum("bqk,bkd->bqd", attn, v.astype(jnp.float32))


if __name__ == "__main__":
    B, S, d_k, d_v = 2, 8, 32, 32

    key = jax.random.PRNGKey(0)
    kq, kk, kv = jax.random.split(key, 3)
    q = jax.random.normal(kq, (B, S, d_k), jnp.float32)
    k = jax.random.normal(kk, (B, S, d_k), jnp.float32)
    v = jax.random.normal(kv, (B, S, d_v), jnp.float32)

    ref = scaled_dot_product_attention_ref(q, k, v)

    # Exact-precision path (f32 MXU inputs); only approx-reciprocal error remains.
    out_f32 = jax.block_until_ready(
        scaled_dot_product_attention(q, k, v, matmul_dtype=jnp.float32))
    assert out_f32.shape == (B, S, d_v)
    assert jnp.allclose(out_f32, ref, atol=5e-3, rtol=5e-3), "f32-path mismatch vs reference"

    # Default fast path: bf16 MXU inputs with f32 accumulation (per perf review).
    out = jax.block_until_ready(scaled_dot_product_attention(q, k, v))
    assert out.shape == (B, S, d_v)
    assert jnp.allclose(out, ref, atol=3e-2, rtol=3e-2), "bf16-path mismatch vs reference"

    print("KERNEL_OK")
</pallas_src>

<mosaic_0001>
module attributes {stable_mosaic.version = 11 : i64} {
  func.func @_sdpa_kernel(%arg0: i32, %arg1: i32, %arg2: i32, %arg3: memref<1x8x32xf32, #tpu.memory_space<vmem>>, %arg4: memref<1x8x32xf32, #tpu.memory_space<vmem>>, %arg5: memref<1x8x128xf32, #tpu.memory_space<vmem>>, %arg6: memref<1x8x128xf32, #tpu.memory_space<vmem>>, %arg7: memref<8x128xf32, #tpu.memory_space<vmem>>, %arg8: memref<8x1xf32, #tpu.memory_space<vmem>>) attributes {dimension_semantics = [#tpu.dimension_semantics<parallel>, #tpu.dimension_semantics<parallel>, #tpu.dimension_semantics<arbitrary>], iteration_bounds = array<i64: 2, 1, 1>, scalar_prefetch = 0 : i64, scratch_operands = 2 : i64, tpu.core_type = #tpu.core_type<tc>, window_params = [{transform_indices = @transform_0, window_bounds = array<i64: 1, 8, 32>}, {transform_indices = @transform_1, window_bounds = array<i64: 1, 8, 32>}, {transform_indices = @transform_2, window_bounds = array<i64: 1, 8, 128>}, {transform_indices = @transform_3, window_bounds = array<i64: 1, 8, 128>}]} {
    %c0_i32 = arith.constant 0 : i32
    %0 = arith.cmpi eq, %arg2, %c0_i32 : i32
    %1 = arith.extui %0 : i1 to i32
    %c0_i32_0 = arith.constant 0 : i32
    %2 = arith.cmpi ne, %1, %c0_i32_0 : i32
    scf.if %2 {
      %cst_22 = arith.constant 0.000000e+00 : f32
      %25 = vector.broadcast %cst_22 : f32 to vector<8x128xf32>
      %c0_23 = arith.constant 0 : index
      %c0_24 = arith.constant 0 : index
      %26 = vector.load %arg7[%c0_23, %c0_24] : memref<8x128xf32, #tpu.memory_space<vmem>>, vector<8x128xf32>
      tpu.vector_store %arg7[%c0_23, %c0_24], %25 {strides = array<i32>} : memref<8x128xf32, #tpu.memory_space<vmem>>, vector<8x128xf32>,
      %cst_25 = arith.constant 0.000000e+00 : f32
      %27 = vector.broadcast %cst_25 : f32 to vector<8x1xf32>
      %c0_26 = arith.constant 0 : index
      %c0_27 = arith.constant 0 : index
      %28 = vector.load %arg8[%c0_26, %c0_27] : memref<8x1xf32, #tpu.memory_space<vmem>>, vector<8x1xf32>
      tpu.vector_store %arg8[%c0_26, %c0_27], %27 {strides = array<i32>} : memref<8x1xf32, #tpu.memory_space<vmem>>, vector<8x1xf32>,
    } else {
    }
    %c0 = arith.constant 0 : index
    %c0_1 = arith.constant 0 : index
    %c0_2 = arith.constant 0 : index
    %3 = vector.load %arg3[%c0, %c0_1, %c0_2] : memref<1x8x32xf32, #tpu.memory_space<vmem>>, vector<1x8x32xf32>
    %4 = vector.shape_cast %3 : vector<1x8x32xf32> to vector<8x32xf32>
    %cst = arith.constant 0.176776692 : f32
    %5 = vector.broadcast %cst : f32 to vector<8x32xf32>
    %6 = arith.mulf %4, %5 : vector<8x32xf32>
    %c0_3 = arith.constant 0 : index
    %c0_4 = arith.constant 0 : index
    %c0_5 = arith.constant 0 : index
    %7 = vector.load %arg4[%c0_3, %c0_4, %c0_5] : memref<1x8x32xf32, #tpu.memory_space<vmem>>, vector<1x8x32xf32>
    %8 = vector.shape_cast %7 : vector<1x8x32xf32> to vector<8x32xf32>
    %cst_6 = arith.constant dense<0.000000e+00> : vector<8x8xf32>
    %9 = tpu.matmul %6, %8, %cst_6 {dimension_numbers = #tpu.dot_dimension_numbers<[1], [1], [0], [0], [0, 0, 1, 0], [], []>} : vector<8x32xf32>, vector<8x32xf32>, vector<8x8xf32> -> vector<8x8xf32>
    %10 = math.exp %9 : vector<8x8xf32>
    %c0_7 = arith.constant 0 : index
    %c0_8 = arith.constant 0 : index
    %11 = vector.load %arg8[%c0_7, %c0_8] : memref<8x1xf32, #tpu.memory_space<vmem>>, vector<8x1xf32>
    %cst_9 = arith.constant dense<0.000000e+00> : vector<8xf32>
    %12 = vector.multi_reduction <add>, %10, %cst_9 [1] : vector<8x8xf32> to vector<8xf32>
    %13 = vector.shape_cast %12 : vector<8xf32> to vector<8x1xf32>
    %14 = arith.addf %11, %13 : vector<8x1xf32>
    %c0_10 = arith.constant 0 : index
    %c0_11 = arith.constant 0 : index
    %15 = vector.load %arg8[%c0_10, %c0_11] : memref<8x1xf32, #tpu.memory_space<vmem>>, vector<8x1xf32>
    tpu.vector_store %arg8[%c0_10, %c0_11], %14 {strides = array<i32>} : memref<8x1xf32, #tpu.memory_space<vmem>>, vector<8x1xf32>,
    %c0_12 = arith.constant 0 : index
    %c0_13 = arith.constant 0 : index
    %16 = vector.load %arg7[%c0_12, %c0_13] : memref<8x128xf32, #tpu.memory_space<vmem>>, vector<8x128xf32>
    %c0_14 = arith.constant 0 : index
    %c0_15 = arith.constant 0 : index
    %c0_16 = arith.constant 0 : index
    %17 = vector.load %arg5[%c0_14, %c0_15, %c0_16] : memref<1x8x128xf32, #tpu.memory_space<vmem>>, vector<1x8x128xf32>
    %18 = vector.shape_cast %17 : vector<1x8x128xf32> to vector<8x128xf32>
    %cst_17 = arith.constant dense<0.000000e+00> : vector<8x128xf32>
    %19 = tpu.matmul %10, %18, %cst_17 {dimension_numbers = #tpu.dot_dimension_numbers<[1], [0], [0], [1], [0, 0, 1, 1], [], []>} : vector<8x8xf32>, vector<8x128xf32>, vector<8x128xf32> -> vector<8x128xf32>
    %20 = arith.addf %16, %19 : vector<8x128xf32>
    %c0_18 = arith.constant 0 : index
    %c0_19 = arith.constant 0 : index
    %21 = vector.load %arg7[%c0_18, %c0_19] : memref<8x128xf32, #tpu.memory_space<vmem>>, vector<8x128xf32>
    tpu.vector_store %arg7[%c0_18, %c0_19], %20 {strides = array<i32>} : memref<8x128xf32, #tpu.memory_space<vmem>>, vector<8x128xf32>,
    %c0_i32_20 = arith.constant 0 : i32
    %22 = arith.cmpi eq, %arg2, %c0_i32_20 : i32
    %23 = arith.extui %22 : i1 to i32
    %c0_i32_21 = arith.constant 0 : i32
    %24 = arith.cmpi ne, %23, %c0_i32_21 : i32
    scf.if %24 {
      %c0_22 = arith.constant 0 : index
      %c0_23 = arith.constant 0 : index
      %25 = vector.load %arg8[%c0_22, %c0_23] : memref<8x1xf32, #tpu.memory_space<vmem>>, vector<8x1xf32>
      %26 = tpu.reciprocal %25 {approx = true} : vector<8x1xf32> -> vector<8x1xf32>
      %c0_24 = arith.constant 0 : index
      %c0_25 = arith.constant 0 : index
      %27 = vector.load %arg7[%c0_24, %c0_25] : memref<8x128xf32, #tpu.memory_space<vmem>>, vector<8x128xf32>
      %28 = vector.broadcast %26 : vector<8x1xf32> to vector<8x128xf32>
      %29 = arith.mulf %27, %28 : vector<8x128xf32>
      %c0_26 = arith.constant 0 : index
      %c0_27 = arith.constant 0 : index
      %c0_28 = arith.constant 0 : index
      %30 = vector.load %arg6[%c0_26, %c0_27, %c0_28] : memref<1x8x128xf32, #tpu.memory_space<vmem>>, vector<1x8x128xf32>
      %31 = vector.shape_cast %30 : vector<1x8x128xf32> to vector<8x128xf32>
      %32 = vector.shape_cast %29 : vector<8x128xf32> to vector<1x8x128xf32>
      tpu.vector_store %arg6[%c0_26, %c0_27, %c0_28], %32 {strides = array<i32>} : memref<1x8x128xf32, #tpu.memory_space<vmem>>, vector<1x8x128xf32>,
    } else {
    }
    return
  }
  func.func @transform_0(%arg0: i32, %arg1: i32, %arg2: i32) -> (i32, i32, i32) {
    %c0_i32 = arith.constant 0 : i32
    %c0_i32_0 = arith.constant 0 : i32
    return %arg0, %arg1, %c0_i32 : i32, i32, i32
  }
  func.func @transform_1(%arg0: i32, %arg1: i32, %arg2: i32) -> (i32, i32, i32) {
    %c0_i32 = arith.constant 0 : i32
    %c0_i32_0 = arith.constant 0 : i32
    return %arg0, %arg2, %c0_i32 : i32, i32, i32
  }
  func.func @transform_2(%arg0: i32, %arg1: i32, %arg2: i32) -> (i32, i32, i32) {
    %c0_i32 = arith.constant 0 : i32
    %c0_i32_0 = arith.constant 0 : i32
    return %arg0, %arg2, %c0_i32 : i32, i32, i32
  }
  func.func @transform_3(%arg0: i32, %arg1: i32, %arg2: i32) -> (i32, i32, i32) {
    %c0_i32 = arith.constant 0 : i32
    %c0_i32_0 = arith.constant 0 : i32
    return %arg0, %arg1, %c0_i32 : i32, i32, i32
  }
}

</mosaic_0001>

<llo_original>
// kernel: tpu_custom_call.1
$region0: #{tpu_custom_call.1}
  #allocation0 [shape = 'u32[]', space=smem, size = 0x4, offset = 0x4, fixed_abs, tag = 'smem constant byte address 0x4 - core index']
  #allocation1 [shape = 'u32[72,128]{1,0:T(1,128)}', space=vmem, size = 0x9000, scoped, tag = 'internal scratch']
  #allocation2 [shape = 'f32[8,128]{1,0:T(8,128)}', space=vmem, size = 0x1000, scoped, tag = 'scratch operand']
  #allocation3 [shape = 'f32[8,1]{1,0:T(8,128)}', space=vmem, size = 0x1000, scoped, tag = 'scratch operand']
  %s0 = inlined_call_operand.hbm [shape: f32[2,8,32], index: 0, kind: input, shape index: {}]
  %s1 = inlined_call_operand.hbm [shape: f32[2,8,32], index: 1, kind: input, shape index: {}]
  %s2 = inlined_call_operand.hbm [shape: f32[2,8,128], index: 2, kind: input, shape index: {}]
  %s3 = inlined_call_operand.hbm [shape: f32[2,8,128], index: 3, kind: output, shape index: {}]
  %s4 = sld [smem:[#allocation0]]
  $region65: #{tpu_custom_call.1} parent=0
    _
  %s6 = ssub.s32 1, %s4
  %s7 = scalar_select 0, %s6, %s4
  $region1: #{tpu_custom_call.1} parent=0
    #allocation4 [shape = 'u8[8192]{0}', space=vmem, size = 0x2000, scoped, tag = 'input window, operand 0']
    #allocation5 [shape = 's32[2]{0}', space=sflag, size = 0x8, scoped, tag = 'scoped memory for tpu_custom_call.1']
    #allocation6 [shape = 's32[2]{0}', space=sflag, size = 0x8, scoped, tag = 'scoped memory for tpu_custom_call.1']
    #allocation7 [shape = 'u8[8192]{0}', space=vmem, size = 0x2000, scoped, tag = 'input window, operand 1']
    #allocation8 [shape = 's32[2]{0}', space=sflag, size = 0x8, scoped, tag = 'scoped memory for tpu_custom_call.1']
    #allocation9 [shape = 'u8[8192]{0}', space=vmem, size = 0x2000, scoped, tag = 'input window, operand 2']
    #allocation10 [shape = 'u8[8192]{0}', space=vmem, size = 0x2000, scoped, tag = 'output window, operand 0']
    %8 = vsyncpa [#allocation5], 0
    %s9 = scalar_lea.sflag [#allocation5], 1
    %10 = vsyncpa %s9, 0
    %11 = vsyncpa [#allocation8], 0
    %s12 = scalar_lea.sflag [#allocation8], 1
    %13 = vsyncpa %s12, 0
    %14 = vsyncpa [#allocation6], 0
    %s15 = scalar_lea.sflag [#allocation6], 1
    %16 = vsyncpa %s15, 0
    loop: start=0, step=1, limit=4
    $region2: #{tpu_custom_call.1} parent=1 // loop_pre_header
      _
    $region3: #{tpu_custom_call.1} parent=1 // loop_header
      %s18 = sphi 0, %s22
      %p19 = scmp.ge.s32.totalorder %s18, 4
      %s25 = sphi 0, %s44
      %s26 = sphi 0, %s40
      %s27 = sphi 0, %s36
      %s28 = sphi 0, %s25
      %s29 = sphi 0, %s26
      %s30 = sphi 0, %s27
      %s31 = sphi 0, %s28
      %s32 = sphi 0, %s29
      %s33 = sphi 0, %s30
      %s49 = sphi 0, %s51
      %s52 = sphi 0, %s49
      %s53 = sphi 0, %s52
      %s69 = sphi 0, %s53
      %s77 = sphi 0, %s79
      %s80 = sphi 0, %s77
      %s81 = sphi 0, %s80
      %s97 = sphi 0, %s81
      %s105 = sphi 0, %s107
      %s108 = sphi 0, %s105
      %s109 = sphi 0, %s108
      %s125 = sphi 0, %s109
      %s133 = sphi 0, %s135
      %s136 = sphi 0, %s133
      %s137 = sphi 0, %s136
      %s153 = sphi 0, %s137
    $region4: #{tpu_custom_call.1} parent=1 // loop_header_branch
      %21 = sbr.rel (%p19) target = $region8
    $region5: #{tpu_custom_call.1} parent=1 // loop_body
      %s23 = ssub.s32 %s18, 1
      %s24 = ssub.s32 %s18, 2
      %s34 = sadd.s32 1, %s27
      %p35 = scmp.ge.s32.totalorder %s34, 1
      %s36 = scalar_select %p35, 0, %s34
      %s37 = sadd.s32 1, %s26
      %s38 = scalar_select %p35, %s37, %s26
      %p39 = scmp.ge.s32.totalorder %s38, 1
      %s40 = scalar_select %p39, 0, %s38
      %s41 = sadd.s32 1, %s25
      %s42 = scalar_select %p39, %s41, %s25
      %p43 = scmp.ge.s32.totalorder %s42, 2
      %s44 = scalar_select %p43, 0, %s42
      %s45 = ssub.s32 %s25, %s44
      %s46 = ssub.s32 %s26, %s40
      %s47 = sor.u32 %s45, %s46
      %p48 = scmp.eq.s32.totalorder %s47, 0
      %s50 = sadd.s32 %s49, 1
      %s51 = scalar_select %p48, %s49, %s50
      %p54 = pneg %p48
      %p55 = scmp.eq.s32.totalorder %s18, 1
      %p56 = por %p54, %p55
      %p57 = scmp.ne.s32.totalorder %s49, %s52
      %p58 = scmp.eq.s32.totalorder %s18, 0
      %p59 = por %p57, %p58
      %p60 = scmp.ne.s32.totalorder %s49, %s52
      %p61 = scmp.eq.s32.totalorder %s23, 1
      %p62 = por %p60, %p61
      %p63 = scmp.ne.s32.totalorder %s52, %s53
      %p64 = scmp.eq.s32.totalorder %s23, 0
      %p65 = por %p63, %p64
      %p66 = scmp.ne.s32.totalorder %s52, %s53
      %p67 = scmp.eq.s32.totalorder %s24, 1
      %p68 = por %p66, %p67
      %p70 = scmp.ne.s32.totalorder %s53, %s69
      %p71 = scmp.eq.s32.totalorder %s24, 0
      %p72 = por %p70, %p71
      %s73 = ssub.s32 %s25, %s44
      %s74 = ssub.s32 %s27, %s36
      %s75 = sor.u32 %s73, %s74
      %p76 = scmp.eq.s32.totalorder %s75, 0
      %s78 = sadd.s32 %s77, 1
      %s79 = scalar_select %p76, %s77, %s78
      %p82 = pneg %p76
      %p83 = scmp.eq.s32.totalorder %s18, 1
      %p84 = por %p82, %p83
      %p85 = scmp.ne.s32.totalorder %s77, %s80
      %p86 = scmp.eq.s32.totalorder %s18, 0
      %p87 = por %p85, %p86
      %p88 = scmp.ne.s32.totalorder %s77, %s80
      %p89 = scmp.eq.s32.totalorder %s23, 1
      %p90 = por %p88, %p89
      %p91 = scmp.ne.s32.totalorder %s80, %s81
      %p92 = scmp.eq.s32.totalorder %s23, 0
      %p93 = por %p91, %p92
      %p94 = scmp.ne.s32.totalorder %s80, %s81
      %p95 = scmp.eq.s32.totalorder %s24, 1
      %p96 = por %p94, %p95
      %p98 = scmp.ne.s32.totalorder %s81, %s97
      %p99 = scmp.eq.s32.totalorder %s24, 0
      %p100 = por %p98, %p99
      %s101 = ssub.s32 %s25, %s44
      %s102 = ssub.s32 %s27, %s36
      %s103 = sor.u32 %s101, %s102
      %p104 = scmp.eq.s32.totalorder %s103, 0
      %s106 = sadd.s32 %s105, 1
      %s107 = scalar_select %p104, %s105, %s106
      %p110 = pneg %p104
      %p111 = scmp.eq.s32.totalorder %s18, 1
      %p112 = por %p110, %p111
      %p113 = scmp.ne.s32.totalorder %s105, %s108
      %p114 = scmp.eq.s32.totalorder %s18, 0
      %p115 = por %p113, %p114
      %p116 = scmp.ne.s32.totalorder %s105, %s108
      %p117 = scmp.eq.s32.totalorder %s23, 1
      %p118 = por %p116, %p117
      %p119 = scmp.ne.s32.totalorder %s108, %s109
      %p120 = scmp.eq.s32.totalorder %s23, 0
      %p121 = por %p119, %p120
      %p122 = scmp.ne.s32.totalorder %s108, %s109
      %p123 = scmp.eq.s32.totalorder %s24, 1
      %p124 = por %p122, %p123
      %p126 = scmp.ne.s32.totalorder %s109, %s125
      %p127 = scmp.eq.s32.totalorder %s24, 0
      %p128 = por %p126, %p127
      %s129 = ssub.s32 %s25, %s44
      %s130 = ssub.s32 %s26, %s40
      %s131 = sor.u32 %s129, %s130
      %p132 = scmp.eq.s32.totalorder %s131, 0
      %s134 = sadd.s32 %s133, 1
      %s135 = scalar_select %p132, %s133, %s134
      %p138 = pneg %p132
      %p139 = scmp.eq.s32.totalorder %s18, 1
      %p140 = por %p138, %p139
      %p141 = scmp.ne.s32.totalorder %s133, %s136
      %p142 = scmp.eq.s32.totalorder %s18, 0
      %p143 = por %p141, %p142
      %p144 = scmp.ne.s32.totalorder %s133, %s136
      %p145 = scmp.eq.s32.totalorder %s23, 1
      %p146 = por %p144, %p145
      %p147 = scmp.ne.s32.totalorder %s136, %s137
      %p148 = scmp.eq.s32.totalorder %s23, 0
      %p149 = por %p147, %p148
      %p150 = scmp.ne.s32.totalorder %s136, %s137
      %p151 = scmp.eq.s32.totalorder %s24, 1
      %p152 = por %p150, %p151
      %p154 = scmp.ne.s32.totalorder %s137, %s153
      %p155 = scmp.eq.s32.totalorder %s24, 0
      %p156 = por %p154, %p155
      %p157 = scmp.le.s32.totalorder 1, %s18
      %p158 = scmp.lt.s32.totalorder %s18, 3
      %p159 = pnand %p157, %p158
      %p160 = pneg %p159
      // Predicated region
      $region9: #{tpu_custom_call.1} parent=5 // pred_check
        _
      $region10: #{tpu_custom_call.1} parent=5 // pred_check_branch
        %162 = sbr.rel (%p159) target = $region12
      $region11: #{tpu_custom_call.1} parent=5 // pred_region
        %s163 = ssub.s32 %s18, 1
      $region12: #{tpu_custom_call.1} parent=5 // pred_fallthru
        _
      %p164 = scmp.lt.s32.totalorder %s18, 2
      // Predicated region
      $region13: #{tpu_custom_call.1} parent=5 // pred_check
        %p165 = pneg %p164
      $region14: #{tpu_custom_call.1} parent=5 // pred_check_branch
        %167 = sbr.rel (%p165) target = $region16
      $region15: #{tpu_custom_call.1} parent=5 // pred_region
        // Predicated region
        $region17: #{tpu_custom_call.1} parent=15 // pred_check
          %p168 = pneg %p59
        $region18: #{tpu_custom_call.1} parent=15 // pred_check_branch
          %170 = sbr.rel (%p168) target = $region20
        $region19: #{tpu_custom_call.1} parent=15 // pred_region
          %s171 = sand.u32 %s49, 1
          %s172 = scalar_lea.sflag [#allocation5], %s171
          %s173 = sand.u32 %s49, 1
          %s174 = smul.addr %s173, 8
          %s175 = scalar_lea.vmem [#allocation4], %s174
          %177 = vsyncadd %s172, 0
          %s178 = sadd.s32 %s26, %s25
          %s179 = smul.addr %s178, 8
          %s180 = scalar_lea.hbm %s0, %s179
          %s182 = sshll.u32 %s180, 4
          %s183 = int_to_ptr.hbm [resolvable:$true] %s182
          %s184 = sshll.u32 %s175, 4
          %s185 = int_to_ptr.vmem [resolvable:$true] %s184
          %187 = dma.hbm_to_vmem [thread:$0]  %s183, 128, %s185, %s172
        $region20: #{tpu_custom_call.1} parent=15 // pred_fallthru
          _
        // Predicated region
        $region21: #{tpu_custom_call.1} parent=15 // pred_check
          %p188 = pneg %p87
        $region22: #{tpu_custom_call.1} parent=15 // pred_check_branch
          %190 = sbr.rel (%p188) target = $region24
        $region23: #{tpu_custom_call.1} parent=15 // pred_region
          %s191 = sand.u32 %s18, 1
          %s192 = scalar_lea.sflag [#allocation8], %s191
          %s193 = sand.u32 %s77, 1
          %s194 = smul.addr %s193, 8
          %s195 = scalar_lea.vmem [#allocation7], %s194
          %197 = vsyncadd %s192, 0
          %s198 = sadd.s32 %s27, %s25
          %s199 = smul.addr %s198, 8
          %s200 = scalar_lea.hbm %s1, %s199
          %s202 = sshll.u32 %s200, 4
          %s203 = int_to_ptr.hbm [resolvable:$true] %s202
          %s204 = sshll.u32 %s195, 4
          %s205 = int_to_ptr.vmem [resolvable:$true] %s204
          %207 = dma.hbm_to_vmem [thread:$0]  %s203, 128, %s205, %s192
        $region24: #{tpu_custom_call.1} parent=15 // pred_fallthru
          _
        // Predicated region
        $region25: #{tpu_custom_call.1} parent=15 // pred_check
          %p208 = pneg %p115
        $region26: #{tpu_custom_call.1} parent=15 // pred_check_branch
          %210 = sbr.rel (%p208) target = $region28
        $region27: #{tpu_custom_call.1} parent=15 // pred_region
          %s211 = sand.u32 %s18, 1
          %s212 = scalar_lea.sflag [#allocation8], %s211
          %s213 = sand.u32 %s105, 1
          %s214 = smul.addr %s213, 8
          %s215 = scalar_lea.vmem [#allocation9], %s214
          %217 = vsyncadd %s212, 0
          %s218 = sadd.s32 %s27, %s25
          %s219 = smul.addr %s218, 8
          %s220 = scalar_lea.hbm %s2, %s219
          %s222 = sshll.u32 %s220, 4
          %s223 = int_to_ptr.hbm [resolvable:$true] %s222
          %s224 = sshll.u32 %s215, 4
          %s225 = int_to_ptr.vmem [resolvable:$true] %s224
          %227 = dma.hbm_to_vmem [thread:$0]  %s223, 128, %s225, %s212
        $region28: #{tpu_custom_call.1} parent=15 // pred_fallthru
          _
      $region16: #{tpu_custom_call.1} parent=5 // pred_fallthru
        _
      %p228 = scmp.le.s32.totalorder 1, %s18
      %p229 = scmp.lt.s32.totalorder %s18, 3
      %p230 = pnand %p228, %p229
      %p231 = pneg %p230
      // Predicated region
      $region29: #{tpu_custom_call.1} parent=5 // pred_check
        _
      $region30: #{tpu_custom_call.1} parent=5 // pred_check_branch
        %233 = sbr.rel (%p230) target = $region32
      $region31: #{tpu_custom_call.1} parent=5 // pred_region
        %s234 = ssub.s32 %s18, 1
        %s235 = sand.u32 %s52, 1
        %s236 = scalar_lea.sflag [#allocation5], %s235
        %s237 = sand.u32 %s52, 1
        %s238 = smul.addr %s237, 8
        %s239 = scalar_lea.vmem [#allocation4], %s238
        // Predicated region
        $region33: #{tpu_custom_call.1} parent=31 // pred_check
          %p240 = pneg %p65
        $region34: #{tpu_custom_call.1} parent=31 // pred_check_branch
          %242 = sbr.rel (%p240) target = $region36
        $region35: #{tpu_custom_call.1} parent=31 // pred_region
          %244 = dma.done %s236, 128
        $region36: #{tpu_custom_call.1} parent=31 // pred_fallthru
          _
        %s245 = sand.u32 %s23, 1
        %s246 = scalar_lea.sflag [#allocation8], %s245
        %s247 = sand.u32 %s80, 1
        %s248 = smul.addr %s247, 8
        %s249 = scalar_lea.vmem [#allocation7], %s248
        // Predicated region
        $region37: #{tpu_custom_call.1} parent=31 // pred_check
          %p250 = pneg %p93
        $region38: #{tpu_custom_call.1} parent=31 // pred_check_branch
          %252 = sbr.rel (%p250) target = $region40
        $region39: #{tpu_custom_call.1} parent=31 // pred_region
          %254 = dma.done %s246, 128
        $region40: #{tpu_custom_call.1} parent=31 // pred_fallthru
          _
        %s255 = sand.u32 %s23, 1
        %s256 = scalar_lea.sflag [#allocation8], %s255
        %s257 = sand.u32 %s108, 1
        %s258 = smul.addr %s257, 8
        %s259 = scalar_lea.vmem [#allocation9], %s258
        // Predicated region
        $region41: #{tpu_custom_call.1} parent=31 // pred_check
          %p260 = pneg %p121
        $region42: #{tpu_custom_call.1} parent=31 // pred_check_branch
          %262 = sbr.rel (%p260) target = $region44
        $region43: #{tpu_custom_call.1} parent=31 // pred_region
          %264 = dma.done %s256, 128
        $region44: #{tpu_custom_call.1} parent=31 // pred_fallthru
          _
        %s265 = sand.u32 %s52, 1
        %s266 = scalar_lea.sflag [#allocation5], %s265
        %s267 = sand.u32 %s52, 1
        %s268 = smul.addr %s267, 8
        %s269 = scalar_lea.vmem [#allocation4], %s268
        %p270 = pneg %p65
        %p271 = pneg %p62
        %s272 = sand.u32 %s23, 1
        %s273 = scalar_lea.sflag [#allocation8], %s272
        %s274 = sand.u32 %s80, 1
        %s275 = smul.addr %s274, 8
        %s276 = scalar_lea.vmem [#allocation7], %s275
        %p277 = pneg %p93
        %p278 = pneg %p90
        %s279 = sand.u32 %s23, 1
        %s280 = scalar_lea.sflag [#allocation8], %s279
        %s281 = sand.u32 %s108, 1
        %s282 = smul.addr %s281, 8
        %s283 = scalar_lea.vmem [#allocation9], %s282
        %p284 = pneg %p121
        %p285 = pneg %p118
        %p286 = pneg %p149
        %p287 = pneg %p146
        %s288 = sand.u32 %s136, 1
        %s289 = scalar_lea.sflag [#allocation6], %s288
        %s290 = sand.u32 %s136, 1
        %s291 = smul.addr %s290, 8
        %s292 = scalar_lea.vmem [#allocation10], %s291
        %p293 = scmp.eq.s32.totalorder %s30, 0
        // Predicated region
        $region45: #{tpu_custom_call.1} parent=31 // pred_check
          %p294 = pneg %p293
        $region46: #{tpu_custom_call.1} parent=31 // pred_check_branch
          %296 = sbr.rel (%p294) target = $region48
        $region47: #{tpu_custom_call.1} parent=31 // pred_region
          %297 = vst [vmem:[#allocation2] sm:$0xff] 0.0
          %vm298 = vcmask 7168
          %299 = vst.msk [vmem:[#allocation3] sm:$0xff] %vm298, 0.0
        $region48: #{tpu_custom_call.1} parent=31 // pred_fallthru
          _
        %v300 = vld [vmem:[%s239] sm:$0xff]
        %v301 = vmul.f32 %v300, 0.17677669
        %v302 = vld [vmem:[%s249] sm:$0xff]
        %vm303 = vcmask 261120
        %v305 = vsel %vm303, %v301, 0
        %v308 = vsel %vm303, %v302, 0
        %310 = vmatpush.xpose.msra.mxu0 0.0
        %311 = vmatpush.xpose.msra.mxu0 0.0
        %312 = vmatpush.xpose.msra.mxu0 0.0
        %313 = vmatpush.xpose.msra.mxu0 0.0
        %314 = vmatpush.xpose.msra.mxu0 0.0
        %315 = vmatpush.xpose.msra.mxu0 0.0
        %316 = vmatpush.xpose.msra.mxu0 0.0
        %317 = vmatpush.xpose.msra.mxu0 0.0
        %318 = vmatpush.xpose.msra.mxu0 0.0
        %319 = vmatpush.xpose.msra.mxu0 0.0
        %320 = vmatpush.xpose.msra.mxu0 0.0
        %321 = vmatpush.xpose.msra.mxu0 0.0
        %322 = vmatpush.xpose.msra.mxu0 0.0
        %323 = vmatpush.xpose.msra.mxu0 0.0
        %324 = vmatpush.xpose.msra.mxu0 0.0
        %325 = vmatpush.xpose.msra.mxu0 %v308
        %326 = vmatmul.f32.gmra.mxu0 %v305
        %v327 = vpop.f32.mrf.mxu0
        %v328 = vadd.f32 0.0, %v327
        %329 = vdwg.mxu0
        %v330 = vmul.f32 %v328, 1.442695
        %v331 = vpow.pop %v330
        %v332 = vld [vmem:[#allocation3] sm:$0xff]
        %vm333 = vcmask 64512
        %v334 = vsel %vm333, %v331, 0.0
        %335 = vadd.xlane.f32.xlu0 %v334
        %v336 = vpop.xlane.xlu0 %335
        %v337 = vadd.f32 %v332, %v336
        %vm338 = vcmask 7168
        %339 = vst.msk [vmem:[#allocation3] sm:$0xff] %vm338, %v337
        %v340 = vld [vmem:[#allocation2] sm:$0xff]
        %v341 = vld [vmem:[%s259] sm:$0xff]
        %v343 = vsel %vm333, %v331, 0
        %345 = vmatpush.msra.mxu0 0.0
        %346 = vmatpush.msra.mxu0 0.0
        %347 = vmatpush.msra.mxu0 0.0
        %348 = vmatpush.msra.mxu0 0.0
        %349 = vmatpush.msra.mxu0 0.0
        %350 = vmatpush.msra.mxu0 0.0
        %351 = vmatpush.msra.mxu0 0.0
        %352 = vmatpush.msra.mxu0 0.0
        %353 = vmatpush.msra.mxu0 0.0
        %354 = vmatpush.msra.mxu0 0.0
        %355 = vmatpush.msra.mxu0 0.0
        %356 = vmatpush.msra.mxu0 0.0
        %357 = vmatpush.msra.mxu0 0.0
        %358 = vmatpush.msra.mxu0 0.0
        %359 = vmatpush.msra.mxu0 0.0
        %360 = vmatpush.msra.mxu0 %v341
        %361 = vmatmul.f32.gmra.mxu0 %v343
        %v362 = vpop.f32.mrf.mxu0
        %v363 = vadd.f32 0.0, %v362
        %364 = vdwg.mxu0
        %v365 = vadd.f32 %v340, %v363
        %366 = vst [vmem:[#allocation2] sm:$0xff] %v365
        // Predicated region
        $region49: #{tpu_custom_call.1} parent=31 // pred_check
          %p367 = pneg %p293
        $region50: #{tpu_custom_call.1} parent=31 // pred_check_branch
          %369 = sbr.rel (%p367) target = $region52
        $region51: #{tpu_custom_call.1} parent=31 // pred_region
          %v370 = vld [vmem:[#allocation3] sm:$0xff]
          %v371 = vrcp.pop %v370
          %v372 = vld [vmem:[#allocation2] sm:$0xff]
          %374 = vset.pattern.permute.xlu0 0
          %375 = vperm.xlu0 %374, %v371
          %v376 = vpop.permute.xlu0 %375
          %v378 = vmul.f32 %v372, %v376
          %379 = vst [vmem:[%s292] sm:$0xff] %v378
        $region52: #{tpu_custom_call.1} parent=31 // pred_fallthru
          _
        %s380 = sand.u32 %s136, 1
        %s381 = scalar_lea.sflag [#allocation6], %s380
        %s382 = sand.u32 %s136, 1
        %s383 = smul.addr %s382, 8
        %s384 = scalar_lea.vmem [#allocation10], %s383
        // Predicated region
        $region53: #{tpu_custom_call.1} parent=31 // pred_check
          %p385 = pneg %p146
        $region54: #{tpu_custom_call.1} parent=31 // pred_check_branch
          %387 = sbr.rel (%p385) target = $region56
        $region55: #{tpu_custom_call.1} parent=31 // pred_region
          %389 = vsyncadd %s381, 0
          %s390 = sadd.s32 %s29, %s28
          %s391 = smul.addr %s390, 8
          %s392 = scalar_lea.hbm %s3, %s391
          %s394 = sshll.u32 %s384, 4
          %s395 = int_to_ptr.vmem [resolvable:$true] %s394
          %s396 = sshll.u32 %s392, 4
          %s397 = int_to_ptr.hbm [resolvable:$true] %s396
          %399 = dma.vmem_to_hbm [thread:$0]  %s395, 128, %s397, %s381
        $region56: #{tpu_custom_call.1} parent=31 // pred_fallthru
          _
      $region32: #{tpu_custom_call.1} parent=5 // pred_fallthru
        _
      %p400 = scmp.le.s32.totalorder 2, %s18
      // Predicated region
      $region57: #{tpu_custom_call.1} parent=5 // pred_check
        %p401 = pneg %p400
      $region58: #{tpu_custom_call.1} parent=5 // pred_check_branch
        %403 = sbr.rel (%p401) target = $region60
      $region59: #{tpu_custom_call.1} parent=5 // pred_region
        %s404 = ssub.s32 %s18, 2
        // Predicated region
        $region61: #{tpu_custom_call.1} parent=59 // pred_check
          %p405 = pneg %p152
        $region62: #{tpu_custom_call.1} parent=59 // pred_check_branch
          %407 = sbr.rel (%p405) target = $region64
        $region63: #{tpu_custom_call.1} parent=59 // pred_region
          %s408 = sand.u32 %s137, 1
          %s409 = scalar_lea.sflag [#allocation6], %s408
          %s410 = sand.u32 %s137, 1
          %s411 = smul.addr %s410, 8
          %s412 = scalar_lea.vmem [#allocation10], %s411
          %414 = dma.done %s409, 128
        $region64: #{tpu_custom_call.1} parent=59 // pred_fallthru
          _
      $region60: #{tpu_custom_call.1} parent=5 // pred_fallthru
        _
    $region6: #{tpu_custom_call.1} parent=1 // loop_footer
      %s22 = sadd.s32 1, %s18
    $region7: #{tpu_custom_call.1} parent=1 // loop_footer_branch
      %17 = sbr.rel target = $region3
    $region8: #{tpu_custom_call.1} parent=1 // loop_exit
      _
    %415 = vsyncpa [#allocation5], 1
    %s416 = scalar_lea.sflag [#allocation5], 1
    %417 = vsyncpa %s416, 1
    %418 = vsyncpa [#allocation8], 1
    %s419 = scalar_lea.sflag [#allocation8], 1
    %420 = vsyncpa %s419, 1
    %421 = vsyncpa [#allocation6], 1
    %s422 = scalar_lea.sflag [#allocation6], 1
    %423 = vsyncpa %s422, 1

</llo_original>
